<compile_context>
chip_gen: v7x
topology: tpu7x:2x2x1
jax: 0.10.0
libtpu: 0.0.40
codegen_flags: <defaults>
</compile_context>

<pallas_src>
import functools
import math

import jax
import jax.numpy as jnp
from jax import lax
from jax.experimental import pallas as pl
from jax.experimental.pallas import tpu as pltpu


_LANES = 1024           # lane-dense slab width (large multiple of 128)
_HALF = _LANES // 2     # Box-Muller emits pairs: draw bits for half the tile
_MAX_BLOCK_ROWS = 256   # 256 * 1024 * 4 B = 1 MiB per f32 buffer per block


def _mix32(x):
    """lowbias32 integer hash: uint32 -> well-mixed uint32 (pure VPU bit ops)."""
    x = x ^ (x >> jnp.uint32(16))
    x = x * jnp.uint32(0x7FEB352D)
    x = x ^ (x >> jnp.uint32(15))
    x = x * jnp.uint32(0x846CA68B)
    x = x ^ (x >> jnp.uint32(16))
    return x


def _bits_to_unit_float(bits):
    """uint32 -> f32 in [1, 2) via the exponent trick (no int->float convert)."""
    mantissa = (bits >> jnp.uint32(9)) | jnp.uint32(0x3F800000)
    return lax.bitcast_convert_type(mantissa, jnp.float32)


def _gaussian_noise_kernel(seed_ref, x_ref, o_ref, *, stddev, block_rows):
    # Globally-unique per-element counter for the *half* tile, so every tile
    # (and every core under "parallel" sharding) gets independent noise.
    row0 = (pl.program_id(0) * block_rows).astype(jnp.uint32)
    rows = lax.broadcasted_iota(jnp.int32, (block_rows, _HALF), 0).astype(jnp.uint32)
    cols = lax.broadcasted_iota(jnp.int32, (block_rows, _HALF), 1).astype(jnp.uint32)
    gidx = (row0 + rows) * jnp.uint32(_HALF) + cols

    # Fold the user seed into a key (scalar path).
    key = _mix32(seed_ref[0].astype(jnp.uint32) * jnp.uint32(0x9E3779B1))

    # Two independent 32-bit draws per pair of output elements.
    bits1 = _mix32((gidx * jnp.uint32(2)) ^ key)
    bits2 = _mix32((gidx * jnp.uint32(2) + jnp.uint32(1)) ^ key)

    # u1 in (0, 1]  (log never sees 0), u2 in [0, 1).
    u1 = jnp.float32(2.0) - _bits_to_unit_float(bits1)
    u2 = _bits_to_unit_float(bits2) - jnp.float32(1.0)

    # Paired Box-Muller: one log + sqrt per TWO outputs, sin+cos reuse them.
    r = jnp.sqrt(jnp.float32(-2.0) * jnp.log(u1))
    theta = jnp.float32(2.0 * math.pi) * u2
    z1 = r * jnp.cos(theta)
    z2 = r * jnp.sin(theta)

    s = jnp.float32(stddev)
    xf = x_ref[...].astype(jnp.float32)
    # Lane-aligned (multiple-of-128) halves -> unmasked, lane-dense stores.
    o_ref[:, :_HALF] = (xf[:, :_HALF] + s * z1).astype(o_ref.dtype)
    o_ref[:, _HALF:] = (xf[:, _HALF:] + s * z2).astype(o_ref.dtype)


def gaussian_noise(x, *, stddev, seed=0, training=True):
    """Forward pass of GaussianNoise. x: (B, C, H, W) NCHW (any shape works)."""
    if not training:
        return x  # eval mode: identity, matches the PyTorch module

    orig_shape = x.shape
    orig_dtype = x.dtype
    total = int(x.size)

    # Flatten to a lane-dense 2-D slab; pad the tail so blocks divide evenly.
    rows = -(-total // _LANES)
    if rows > _MAX_BLOCK_ROWS:
        block_rows = _MAX_BLOCK_ROWS
        rows_padded = (-(-rows // block_rows)) * block_rows
    else:
        block_rows = rows
        rows_padded = rows
    padded_total = rows_padded * _LANES

    flat = x.reshape(-1)
    if padded_total != total:
        flat = jnp.pad(flat, (0, padded_total - total))
    slab = flat.reshape(rows_padded, _LANES)

    grid = (rows_padded // block_rows,)
    seed_arr = jnp.array([seed], dtype=jnp.int32)

    kernel = functools.partial(
        _gaussian_noise_kernel, stddev=float(stddev), block_rows=block_rows)

    cost = pl.CostEstimate(
        flops=int(12 * padded_total),
        transcendentals=int(2 * padded_total),  # (log+sqrt+sin+cos) per 2 elems
        bytes_accessed=int(2 * padded_total * slab.dtype.itemsize),
    )

    out = pl.pallas_call(
        kernel,
        out_shape=jax.ShapeDtypeStruct(slab.shape, orig_dtype),
        grid=grid,
        in_specs=[
            pl.BlockSpec(memory_space=pltpu.MemorySpace.SMEM),      # seed scalar
            pl.BlockSpec((block_rows, _LANES), lambda i: (i, 0)),   # x tile
        ],
        out_specs=pl.BlockSpec((block_rows, _LANES), lambda i: (i, 0)),
        compiler_params=pltpu.CompilerParams(
            dimension_semantics=("parallel",)),  # shard tiles across TCs (v7x)
        cost_estimate=cost,
    )(seed_arr, slab)

    # Drop padded lanes before reshaping back so no padded noise leaks.
    return out.reshape(-1)[:total].reshape(orig_shape)


if __name__ == "__main__":
    key = jax.random.PRNGKey(0)
    B, C, H, W = 2, 4, 16, 16
    x = jax.random.normal(key, (B, C, H, W), dtype=jnp.float32)

    stddev = 0.1
    y = gaussian_noise(x, stddev=stddev, seed=1234, training=True)
    y = jax.block_until_ready(y)

    # Sanity checks: shape/dtype preserved, noise has roughly the right scale.
    assert y.shape == x.shape and y.dtype == x.dtype
    diff = y - x
    assert jnp.all(jnp.isfinite(diff))
    emp_std = float(jnp.std(diff))
    emp_mean = float(jnp.mean(diff))
    assert 0.02 < emp_std < 0.5, f"unexpected noise std {emp_std}"
    assert abs(emp_mean) < 0.05, f"unexpected noise mean {emp_mean}"

    # Determinism for a fixed seed.
    y2 = gaussian_noise(x, stddev=stddev, seed=1234, training=True)
    assert bool(jnp.all(y == y2))

    # Eval mode is identity.
    y_eval = gaussian_noise(x, stddev=stddev, seed=1234, training=False)
    assert bool(jnp.all(y_eval == x))

    print("KERNEL_OK")
</pallas_src>

<mosaic_0001>
module attributes {stable_mosaic.version = 11 : i64} {
  func.func @_gaussian_noise_kernel(%arg0: i32, %arg1: memref<1xi32, #tpu.memory_space<smem>>, %arg2: memref<2x1024xf32, #tpu.memory_space<vmem>>, %arg3: memref<2x1024xf32, #tpu.memory_space<vmem>>) attributes {dimension_semantics = [#tpu.dimension_semantics<parallel>], iteration_bounds = array<i64: 1>, scalar_prefetch = 0 : i64, scratch_operands = 0 : i64, tpu.core_type = #tpu.core_type<tc>, window_params = [{transform_indices = @transform_0, window_bounds = array<i64: 1>}, {transform_indices = @transform_1, window_bounds = array<i64: 2, 1024>}, {transform_indices = @transform_2, window_bounds = array<i64: 2, 1024>}]} {
    %c2_i32 = arith.constant 2 : i32
    %0 = arith.muli %arg0, %c2_i32 : i32
    %1 = tpu.iota {dimensions = array<i32: 0>} : vector<2x512xi32>
    %2 = tpu.iota {dimensions = array<i32: 1>} : vector<2x512xi32>
    %3 = vector.broadcast %0 : i32 to vector<2x512xi32>
    %4 = arith.addi %3, %1 : vector<2x512xi32>
    %c512_i32 = arith.constant 512 : i32
    %5 = vector.broadcast %c512_i32 : i32 to vector<2x512xi32>
    %6 = arith.muli %4, %5 : vector<2x512xi32>
    %7 = arith.addi %6, %2 : vector<2x512xi32>
    %c0 = arith.constant 0 : index
    %8 = memref.load %arg1[%c0] : memref<1xi32, #tpu.memory_space<smem>>
    %c-1640531535_i32 = arith.constant -1640531535 : i32
    %9 = arith.muli %8, %c-1640531535_i32 : i32
    %c16_i32 = arith.constant 16 : i32
    %10 = arith.shrui %9, %c16_i32 : i32
    %11 = arith.xori %9, %10 : i32
    %c2146121005_i32 = arith.constant 2146121005 : i32
    %12 = arith.muli %11, %c2146121005_i32 : i32
    %c15_i32 = arith.constant 15 : i32
    %13 = arith.shrui %12, %c15_i32 : i32
    %14 = arith.xori %12, %13 : i32
    %c-2073254261_i32 = arith.constant -2073254261 : i32
    %15 = arith.muli %14, %c-2073254261_i32 : i32
    %c16_i32_0 = arith.constant 16 : i32
    %16 = arith.shrui %15, %c16_i32_0 : i32
    %17 = arith.xori %15, %16 : i32
    %c2_i32_1 = arith.constant 2 : i32
    %18 = vector.broadcast %c2_i32_1 : i32 to vector<2x512xi32>
    %19 = arith.muli %7, %18 : vector<2x512xi32>
    %20 = vector.broadcast %17 : i32 to vector<2x512xi32>
    %21 = arith.xori %19, %20 : vector<2x512xi32>
    %c16_i32_2 = arith.constant 16 : i32
    %22 = vector.broadcast %c16_i32_2 : i32 to vector<2x512xi32>
    %23 = arith.shrui %21, %22 : vector<2x512xi32>
    %24 = arith.xori %21, %23 : vector<2x512xi32>
    %c2146121005_i32_3 = arith.constant 2146121005 : i32
    %25 = vector.broadcast %c2146121005_i32_3 : i32 to vector<2x512xi32>
    %26 = arith.muli %24, %25 : vector<2x512xi32>
    %c15_i32_4 = arith.constant 15 : i32
    %27 = vector.broadcast %c15_i32_4 : i32 to vector<2x512xi32>
    %28 = arith.shrui %26, %27 : vector<2x512xi32>
    %29 = arith.xori %26, %28 : vector<2x512xi32>
    %c-2073254261_i32_5 = arith.constant -2073254261 : i32
    %30 = vector.broadcast %c-2073254261_i32_5 : i32 to vector<2x512xi32>
    %31 = arith.muli %29, %30 : vector<2x512xi32>
    %c16_i32_6 = arith.constant 16 : i32
    %32 = vector.broadcast %c16_i32_6 : i32 to vector<2x512xi32>
    %33 = arith.shrui %31, %32 : vector<2x512xi32>
    %34 = arith.xori %31, %33 : vector<2x512xi32>
    %c2_i32_7 = arith.constant 2 : i32
    %35 = vector.broadcast %c2_i32_7 : i32 to vector<2x512xi32>
    %36 = arith.muli %7, %35 : vector<2x512xi32>
    %c1_i32 = arith.constant 1 : i32
    %37 = vector.broadcast %c1_i32 : i32 to vector<2x512xi32>
    %38 = arith.addi %36, %37 : vector<2x512xi32>
    %39 = vector.broadcast %17 : i32 to vector<2x512xi32>
    %40 = arith.xori %38, %39 : vector<2x512xi32>
    %c16_i32_8 = arith.constant 16 : i32
    %41 = vector.broadcast %c16_i32_8 : i32 to vector<2x512xi32>
    %42 = arith.shrui %40, %41 : vector<2x512xi32>
    %43 = arith.xori %40, %42 : vector<2x512xi32>
    %c2146121005_i32_9 = arith.constant 2146121005 : i32
    %44 = vector.broadcast %c2146121005_i32_9 : i32 to vector<2x512xi32>
    %45 = arith.muli %43, %44 : vector<2x512xi32>
    %c15_i32_10 = arith.constant 15 : i32
    %46 = vector.broadcast %c15_i32_10 : i32 to vector<2x512xi32>
    %47 = arith.shrui %45, %46 : vector<2x512xi32>
    %48 = arith.xori %45, %47 : vector<2x512xi32>
    %c-2073254261_i32_11 = arith.constant -2073254261 : i32
    %49 = vector.broadcast %c-2073254261_i32_11 : i32 to vector<2x512xi32>
    %50 = arith.muli %48, %49 : vector<2x512xi32>
    %c16_i32_12 = arith.constant 16 : i32
    %51 = vector.broadcast %c16_i32_12 : i32 to vector<2x512xi32>
    %52 = arith.shrui %50, %51 : vector<2x512xi32>
    %53 = arith.xori %50, %52 : vector<2x512xi32>
    %c9_i32 = arith.constant 9 : i32
    %54 = vector.broadcast %c9_i32 : i32 to vector<2x512xi32>
    %55 = arith.shrui %34, %54 : vector<2x512xi32>
    %c1065353216_i32 = arith.constant 1065353216 : i32
    %56 = vector.broadcast %c1065353216_i32 : i32 to vector<2x512xi32>
    %57 = arith.ori %55, %56 : vector<2x512xi32>
    %58 = tpu.bitcast %57 : vector<2x512xi32> -> vector<2x512xf32>
    %cst = arith.constant 2.000000e+00 : f32
    %59 = vector.broadcast %cst : f32 to vector<2x512xf32>
    %60 = arith.subf %59, %58 : vector<2x512xf32>
    %c9_i32_13 = arith.constant 9 : i32
    %61 = vector.broadcast %c9_i32_13 : i32 to vector<2x512xi32>
    %62 = arith.shrui %53, %61 : vector<2x512xi32>
    %c1065353216_i32_14 = arith.constant 1065353216 : i32
    %63 = vector.broadcast %c1065353216_i32_14 : i32 to vector<2x512xi32>
    %64 = arith.ori %62, %63 : vector<2x512xi32>
    %65 = tpu.bitcast %64 : vector<2x512xi32> -> vector<2x512xf32>
    %cst_15 = arith.constant 1.000000e+00 : f32
    %66 = vector.broadcast %cst_15 : f32 to vector<2x512xf32>
    %67 = arith.subf %65, %66 : vector<2x512xf32>
    %68 = math.log %60 : vector<2x512xf32>
    %cst_16 = arith.constant -2.000000e+00 : f32
    %69 = vector.broadcast %cst_16 : f32 to vector<2x512xf32>
    %70 = arith.mulf %69, %68 : vector<2x512xf32>
    %71 = math.sqrt %70 : vector<2x512xf32>
    %cst_17 = arith.constant 6.28318548 : f32
    %72 = vector.broadcast %cst_17 : f32 to vector<2x512xf32>
    %73 = arith.mulf %72, %67 : vector<2x512xf32>
    %74 = math.cos %73 : vector<2x512xf32>
    %75 = arith.mulf %71, %74 : vector<2x512xf32>
    %76 = math.sin %73 : vector<2x512xf32>
    %77 = arith.mulf %71, %76 : vector<2x512xf32>
    %c0_18 = arith.constant 0 : index
    %c0_19 = arith.constant 0 : index
    %78 = vector.load %arg2[%c0_18, %c0_19] : memref<2x1024xf32, #tpu.memory_space<vmem>>, vector<2x1024xf32>
    %79 = vector.extract_strided_slice %78 {offsets = [0, 0], sizes = [2, 512], strides = [1, 1]} : vector<2x1024xf32> to vector<2x512xf32>
    %cst_20 = arith.constant 1.000000e-01 : f32
    %80 = vector.broadcast %cst_20 : f32 to vector<2x512xf32>
    %81 = arith.mulf %80, %75 : vector<2x512xf32>
    %82 = arith.addf %79, %81 : vector<2x512xf32>
    %c0_21 = arith.constant 0 : index
    %c0_22 = arith.constant 0 : index
    %83 = vector.load %arg3[%c0_21, %c0_22] : memref<2x1024xf32, #tpu.memory_space<vmem>>, vector<2x512xf32>
    tpu.vector_store %arg3[%c0_21, %c0_22], %82 {strides = array<i32>} : memref<2x1024xf32, #tpu.memory_space<vmem>>, vector<2x512xf32>,
    %84 = vector.extract_strided_slice %78 {offsets = [0, 512], sizes = [2, 512], strides = [1, 1]} : vector<2x1024xf32> to vector<2x512xf32>
    %cst_23 = arith.constant 1.000000e-01 : f32
    %85 = vector.broadcast %cst_23 : f32 to vector<2x512xf32>
    %86 = arith.mulf %85, %77 : vector<2x512xf32>
    %87 = arith.addf %84, %86 : vector<2x512xf32>
    %c0_24 = arith.constant 0 : index
    %c512 = arith.constant 512 : index
    %88 = vector.load %arg3[%c0_24, %c512] : memref<2x1024xf32, #tpu.memory_space<vmem>>, vector<2x512xf32>
    tpu.vector_store %arg3[%c0_24, %c512], %87 {strides = array<i32>} : memref<2x1024xf32, #tpu.memory_space<vmem>>, vector<2x512xf32>,
    return
  }
  func.func @transform_0(%arg0: i32) -> i32 {
    %c0_i32 = arith.constant 0 : i32
    %c0_i32_0 = arith.constant 0 : i32
    return %c0_i32 : i32
  }
  func.func @transform_1(%arg0: i32) -> (i32, i32) {
    %c0_i32 = arith.constant 0 : i32
    %c0_i32_0 = arith.constant 0 : i32
    return %arg0, %c0_i32 : i32, i32
  }
  func.func @transform_2(%arg0: i32) -> (i32, i32) {
    %c0_i32 = arith.constant 0 : i32
    %c0_i32_0 = arith.constant 0 : i32
    return %arg0, %c0_i32 : i32, i32
  }
}

</mosaic_0001>

<llo_original>
// kernel: tpu_custom_call.1
$region0: #{tpu_custom_call.1}
  #allocation0 [shape = 'u32[]', space=smem, size = 0x4, offset = 0x4, fixed_abs, tag = 'smem constant byte address 0x4 - core index']
  #allocation1 [shape = 'u32[144,128]{1,0:T(1,128)}', space=vmem, size = 0x12000, scoped, tag = 'internal scratch']
  #allocation2 [shape = 's32[1]{0:T(128)S(6)}', space=smem, size = 0x200, scoped, tag = 'scoped memory for tpu_custom_call.1']
  %s0 = inlined_call_operand.<no memory space> [shape: s32[1], index: 0, kind: input, shape index: {}]
  %s1 = inlined_call_operand.hbm [shape: f32[2,1024], index: 1, kind: input, shape index: {}]
  %s2 = inlined_call_operand.hbm [shape: f32[2,1024], index: 2, kind: output, shape index: {}]
  %s3 = sld [smem:[#allocation0]]
  $region22: #{tpu_custom_call.1} parent=0
    _
  %s5 = ssub.s32 1, %s3
  %s6 = scalar_select 0, %s5, %s3
  %7 = sst [smem:[#allocation2]] %s0
  $region1: #{tpu_custom_call.1} parent=0
    #allocation3 [shape = 'u8[8192]{0}', space=vmem, size = 0x2000, scoped, tag = 'input window, operand 1, single buffered']
    #allocation4 [shape = 's32[1]{0}', space=sflag, size = 0x4, scoped, tag = 'scoped memory for tpu_custom_call.1']
    #allocation5 [shape = 's32[1]{0}', space=sflag, size = 0x4, scoped, tag = 'scoped memory for tpu_custom_call.1']
    #allocation6 [shape = 'u8[8192]{0}', space=vmem, size = 0x2000, scoped, tag = 'output window, operand 0, single buffered']
    %8 = vsyncpa [#allocation4], 0
    %9 = vsyncpa [#allocation5], 0
    // Predicated region
    $region2: #{tpu_custom_call.1} parent=1 // pred_check
      _
    $region3: #{tpu_custom_call.1} parent=1 // pred_check_branch
      %11 = sbr.rel (0) target = $region5
    $region4: #{tpu_custom_call.1} parent=1 // pred_region
      _
    $region5: #{tpu_custom_call.1} parent=1 // pred_fallthru
      _
    // Predicated region
    $region6: #{tpu_custom_call.1} parent=1 // pred_check
      _
    $region7: #{tpu_custom_call.1} parent=1 // pred_check_branch
      %13 = sbr.rel (0) target = $region9
    $region8: #{tpu_custom_call.1} parent=1 // pred_region
      %s15 = ssub.s32 256, 256
      %16 = vsyncadd [#allocation4], %s15
      %s18 = sshll.u32 [#allocation3], 4
      %s19 = int_to_ptr.vmem [resolvable:$true] %s18
      %21 = dma.hbm_to_vmem [thread:$0]  %s1, 256, %s19, [#allocation4]
    $region9: #{tpu_custom_call.1} parent=1 // pred_fallthru
      _
    // Predicated region
    $region10: #{tpu_custom_call.1} parent=1 // pred_check
      _
    $region11: #{tpu_custom_call.1} parent=1 // pred_check_branch
      %23 = sbr.rel (0) target = $region13
    $region12: #{tpu_custom_call.1} parent=1 // pred_region
      %24 = dma.done [#allocation4], 256
    $region13: #{tpu_custom_call.1} parent=1 // pred_fallthru
      _
    %s25 = smul.u32 0, 2
    %v26 = vlaneseq
    %v27 = vshrl.u32 %v26, 7
    %v28 = vlaneseq
    %v29 = vand.u32 %v28, 127
    %v30 = vadd.s32 %v29, 128
    %v31 = vadd.s32 %v29, 256
    %v32 = vadd.s32 %v29, 384
    %v33 = vstv %s25
    %v34 = vadd.s32 %v33, %v27
    %v35 = vmul.u32 %v34, 512
    %v36 = vadd.s32 %v35, %v29
    %v37 = vadd.s32 %v35, %v30
    %v38 = vadd.s32 %v35, %v31
    %v39 = vadd.s32 %v35, %v32
    %s40 = sld [smem:[#allocation2]]
    %s41 = smul.u32 %s40, 2654435761
    %s42 = sshrl.u32 %s41, 16
    %s43 = sxor.u32 %s41, %s42
    %s44 = smul.u32 %s43, 2146121005
    %s45 = sshrl.u32 %s44, 15
    %s46 = sxor.u32 %s44, %s45
    %s47 = smul.u32 %s46, 2221713035
    %s48 = sshrl.u32 %s47, 16
    %s49 = sxor.u32 %s47, %s48
    %v50 = vmul.u32 %v36, 2
    %v51 = vmul.u32 %v37, 2
    %v52 = vmul.u32 %v38, 2
    %v53 = vmul.u32 %v39, 2
    %v54 = vstv %s49
    %v55 = vxor.u32 %v50, %v54
    %v56 = vxor.u32 %v51, %v54
    %v57 = vxor.u32 %v52, %v54
    %v58 = vxor.u32 %v53, %v54
    %v59 = vshrl.u32 %v55, 16
    %v60 = vshrl.u32 %v56, 16
    %v61 = vshrl.u32 %v57, 16
    %v62 = vshrl.u32 %v58, 16
    %v63 = vxor.u32 %v55, %v59
    %v64 = vxor.u32 %v56, %v60
    %v65 = vxor.u32 %v57, %v61
    %v66 = vxor.u32 %v58, %v62
    %v67 = vmul.u32 %v63, 2146121005
    %v68 = vmul.u32 %v64, 2146121005
    %v69 = vmul.u32 %v65, 2146121005
    %v70 = vmul.u32 %v66, 2146121005
    %v71 = vshrl.u32 %v67, 15
    %v72 = vshrl.u32 %v68, 15
    %v73 = vshrl.u32 %v69, 15
    %v74 = vshrl.u32 %v70, 15
    %v75 = vxor.u32 %v67, %v71
    %v76 = vxor.u32 %v68, %v72
    %v77 = vxor.u32 %v69, %v73
    %v78 = vxor.u32 %v70, %v74
    %v79 = vmul.u32 %v75, 2221713035
    %v80 = vmul.u32 %v76, 2221713035
    %v81 = vmul.u32 %v77, 2221713035
    %v82 = vmul.u32 %v78, 2221713035
    %v83 = vshrl.u32 %v79, 16
    %v84 = vshrl.u32 %v80, 16
    %v85 = vshrl.u32 %v81, 16
    %v86 = vshrl.u32 %v82, 16
    %v87 = vxor.u32 %v79, %v83
    %v88 = vxor.u32 %v80, %v84
    %v89 = vxor.u32 %v81, %v85
    %v90 = vxor.u32 %v82, %v86
    %v91 = vadd.s32 %v50, 1
    %v92 = vadd.s32 %v51, 1
    %v93 = vadd.s32 %v52, 1
    %v94 = vadd.s32 %v53, 1
    %v95 = vxor.u32 %v91, %v54
    %v96 = vxor.u32 %v92, %v54
    %v97 = vxor.u32 %v93, %v54
    %v98 = vxor.u32 %v94, %v54
    %v99 = vshrl.u32 %v95, 16
    %v100 = vshrl.u32 %v96, 16
    %v101 = vshrl.u32 %v97, 16
    %v102 = vshrl.u32 %v98, 16
    %v103 = vxor.u32 %v95, %v99
    %v104 = vxor.u32 %v96, %v100
    %v105 = vxor.u32 %v97, %v101
    %v106 = vxor.u32 %v98, %v102
    %v107 = vmul.u32 %v103, 2146121005
    %v108 = vmul.u32 %v104, 2146121005
    %v109 = vmul.u32 %v105, 2146121005
    %v110 = vmul.u32 %v106, 2146121005
    %v111 = vshrl.u32 %v107, 15
    %v112 = vshrl.u32 %v108, 15
    %v113 = vshrl.u32 %v109, 15
    %v114 = vshrl.u32 %v110, 15
    %v115 = vxor.u32 %v107, %v111
    %v116 = vxor.u32 %v108, %v112
    %v117 = vxor.u32 %v109, %v113
    %v118 = vxor.u32 %v110, %v114
    %v119 = vmul.u32 %v115, 2221713035
    %v120 = vmul.u32 %v116, 2221713035
    %v121 = vmul.u32 %v117, 2221713035
    %v122 = vmul.u32 %v118, 2221713035
    %v123 = vshrl.u32 %v119, 16
    %v124 = vshrl.u32 %v120, 16
    %v125 = vshrl.u32 %v121, 16
    %v126 = vshrl.u32 %v122, 16
    %v127 = vxor.u32 %v119, %v123
    %v128 = vxor.u32 %v120, %v124
    %v129 = vxor.u32 %v121, %v125
    %v130 = vxor.u32 %v122, %v126
    %v131 = vshrl.u32 %v87, 9
    %v132 = vshrl.u32 %v88, 9
    %v133 = vshrl.u32 %v89, 9
    %v134 = vshrl.u32 %v90, 9
    %v135 = vor.u32 %v131, 1065353216
    %v136 = vor.u32 %v132, 1065353216
    %v137 = vor.u32 %v133, 1065353216
    %v138 = vor.u32 %v134, 1065353216
    %v143 = vsub.f32 2.0, %v135
    %v144 = vsub.f32 2.0, %v136
    %v145 = vsub.f32 2.0, %v137
    %v146 = vsub.f32 2.0, %v138
    %v147 = vshrl.u32 %v127, 9
    %v148 = vshrl.u32 %v128, 9
    %v149 = vshrl.u32 %v129, 9
    %v150 = vshrl.u32 %v130, 9
    %v151 = vor.u32 %v147, 1065353216
    %v152 = vor.u32 %v148, 1065353216
    %v153 = vor.u32 %v149, 1065353216
    %v154 = vor.u32 %v150, 1065353216
    %v159 = vsub.f32 %v151, 1.0
    %v160 = vsub.f32 %v152, 1.0
    %v161 = vsub.f32 %v153, 1.0
    %v162 = vsub.f32 %v154, 1.0
    %v163 = vlog2.pop %v143
    %v164 = vmul.f32 %v163, 0.6931472
    %v165 = vlog2.pop %v144
    %v166 = vmul.f32 %v165, 0.6931472
    %v167 = vlog2.pop %v145
    %v168 = vmul.f32 %v167, 0.6931472
    %v169 = vlog2.pop %v146
    %v170 = vmul.f32 %v169, 0.6931472
    %v171 = vmul.f32 %v164, -2.0
    %v172 = vmul.f32 %v166, -2.0
    %v173 = vmul.f32 %v168, -2.0
    %v174 = vmul.f32 %v170, -2.0
    %v175 = vrsqrt.pop %v171
    %v176 = vmul.f32 %v171, %v175
    %vm177 = vcmp.eq.f32.partialorder %v171, inf
    %v178 = vsel %vm177, %v171, %v176
    %vm179 = vcmp.eq.f32.partialorder %v171, 0.0
    %v180 = vand.u32 %v171, 2147483648
    %v181 = vsel %vm179, %v180, %v178
    %v182 = vrsqrt.pop %v172
    %v183 = vmul.f32 %v172, %v182
    %vm184 = vcmp.eq.f32.partialorder %v172, inf
    %v185 = vsel %vm184, %v172, %v183
    %vm186 = vcmp.eq.f32.partialorder %v172, 0.0
    %v187 = vand.u32 %v172, 2147483648
    %v188 = vsel %vm186, %v187, %v185
    %v189 = vrsqrt.pop %v173
    %v190 = vmul.f32 %v173, %v189
    %vm191 = vcmp.eq.f32.partialorder %v173, inf
    %v192 = vsel %vm191, %v173, %v190
    %vm193 = vcmp.eq.f32.partialorder %v173, 0.0
    %v194 = vand.u32 %v173, 2147483648
    %v195 = vsel %vm193, %v194, %v192
    %v196 = vrsqrt.pop %v174
    %v197 = vmul.f32 %v174, %v196
    %vm198 = vcmp.eq.f32.partialorder %v174, inf
    %v199 = vsel %vm198, %v174, %v197
    %vm200 = vcmp.eq.f32.partialorder %v174, 0.0
    %v201 = vand.u32 %v174, 2147483648
    %v202 = vsel %vm200, %v201, %v199
    %v203 = vmul.f32 %v159, 6.2831855
    %v204 = vmul.f32 %v160, 6.2831855
    %v205 = vmul.f32 %v161, 6.2831855
    %v206 = vmul.f32 %v162, 6.2831855
    %v207 = vand.u32 2147483647, %v203
    %vm208 = vcmp.le.f32.partialorder %v207, 0.7853982
    %vm209 = vcmp.lt.s32.totalorder %v203, 0
    %v210 = vand.u32 %v203, 2139095040
    %v211 = vshrl.u32 %v210, 23
    %v212 = vsub.s32 %v211, 127
    %v213 = vand.u32 2147483647, %v203
    %v214 = vand.u32 %v213, 8388607
    %v215 = vor.u32 %v214, 8388608
    %v216 = vsub.s32 0, %v215
    %v217 = vadd.s32 %v212, 1
    %vm218 = vcmp.gt.s32.totalorder %v217, 0
    %v219 = vsel %vm218, %v217, 0
    %v220 = vshrl.u32 %v219, 5
    %v221 = vand.u32 %v219, 31
    %v222 = vsub.s32 32, %v221
    %v223 = vshrl.u32 683565275, %v222
    %v224 = vshll.u32 683565275, %v221
    %v225 = vshrl.u32 2475754826, %v222
    %v226 = vor.u32 %v224, %v225
    %v227 = vshll.u32 2475754826, %v221
    %v228 = vshrl.u32 2131351028, %v222
    %v229 = vor.u32 %v227, %v228
    %v230 = vshll.u32 2131351028, %v221
    %v231 = vshrl.u32 2102212464, %v222
    %v232 = vor.u32 %v230, %v231
    %v233 = vshll.u32 2102212464, %v221
    %v234 = vshrl.u32 920167782, %v222
    %v235 = vor.u32 %v233, %v234
    %v236 = vshll.u32 920167782, %v221
    %v237 = vshrl.u32 1326507024, %v222
    %v238 = vor.u32 %v236, %v237
    %vm239 = vcmp.lt.s32.totalorder %v220, 1
    %vm240 = vcmp.lt.s32.totalorder %v220, 2
    %vm241 = vcmp.lt.s32.totalorder %v220, 3
    %vm242 = vcmp.lt.s32.totalorder %v220, 4
    %v243 = vsel %vm239, %v223, %v226
    %v244 = vsel %vm242, %v232, 2102212464
    %v245 = vsel %vm241, %v229, %v244
    %v246 = vsel %vm240, %v243, %v245
    %v247 = vsel %vm239, %v226, %v229
    %v248 = vsel %vm242, %v235, 920167782
    %v249 = vsel %vm241, %v232, %v248
    %v250 = vsel %vm240, %v247, %v249
    %v251 = vsel %vm239, %v229, %v232
    %v252 = vsel %vm242, %v238, 1326507024
    %v253 = vsel %vm241, %v235, %v252
    %v254 = vsel %vm240, %v251, %v253
    %v255 = vshll.u32 %v215, 8
    %v256 = vmul.u32.u64.compose %v255, %v254
    %v257 = vextract.low.u32 %v256
    %v258 = vextract.high.u32 %v256
    %v259 = vmul.u32.u64.compose %v255, %v250
    %v260 = vextract.low.u32 %v259
    %v261 = vextract.high.u32 %v259
    %v262 = vmul.u32 %v255, %v246
    %v263 = vadd.s32 %v258, %v260
    %vm264 = vc.u32 %v258, %v260
    %v265 = vadd.s32 %v261, 1
    %v266 = vsel %vm264, %v265, %v261
    %v267 = vadd.s32 %v262, %v266
    %v268 = vadd.s32 %v267, 536870912
    %v269 = vshrl.u32 %v268, 30
    %v270 = vshll.u32 %v269, 30
    %v271 = vsub.s32 %v267, %v270
    %vm272 = vcmp.lt.s32.totalorder %v271, 0
    %v273 = vsub.s32 0, %v271
    %v274 = vsel %vm272, %v273, %v271
    %v275 = vclz %v274
    %v276 = vsub.s32 %v275, 2
    %vm277 = vcmp.gt.s32.totalorder 0, %v276
    %v278 = vsel %vm277, 0, %v276
    %v279 = vsub.s32 32, %v278
    %v280 = vshll.u32 %v271, %v278
    %v281 = vshrl.u32 %v263, %v279
    %v282 = vor.u32 %v280, %v281
    %v283 = vsub.s32 4294967266, %v278
    %v284 = vadd.s32 %v283, 127
    %v285 = vshll.u32 %v284, 23
    %v286 = vor.u32 4788187, %v285
    %v287 = vand.u32 2147483647, %v286
    %v289 = vcvt.s32.f32 %v282
    %v290 = vmul.f32 %v289, %v287
    %v291 = vxor.u32 %v290, 2147483648
    %v292 = vsel %vm209, %v291, %v290
    %v293 = vsub.s32 4, %v269
    %v294 = vsel %vm209, %v293, %v269
    %v295 = vsel %vm208, %v203, %v292
    %v296 = vsel %vm208, 0, %v294
    %v297 = vcosq.f32.pop %v295
    %v298 = vsinq.f32.pop %v295
    %vm299 = vweird.f32 %v203
    %v300 = vand.u32 %v296, 3
    %vm301 = vcmp.lt.s32.totalorder %v300, 2
    %vm302 = vcmp.eq.s32.totalorder %v300, 0
    %v303 = vxor.u32 %v298, 2147483648
    %v304 = vsel %vm302, %v297, %v303
    %vm305 = vcmp.eq.s32.totalorder %v300, 2
    %v306 = vxor.u32 %v297, 2147483648
    %v307 = vsel %vm305, %v306, %v298
    %v308 = vsel %vm301, %v304, %v307
    %v309 = vsel %vm299, nan, %v308
    %v310 = vand.u32 2147483647, %v204
    %vm311 = vcmp.le.f32.partialorder %v310, 0.7853982
    %vm312 = vcmp.lt.s32.totalorder %v204, 0
    %v313 = vand.u32 %v204, 2139095040
    %v314 = vshrl.u32 %v313, 23
    %v315 = vsub.s32 %v314, 127
    %v316 = vand.u32 2147483647, %v204
    %v317 = vand.u32 %v316, 8388607
    %v318 = vor.u32 %v317, 8388608
    %v319 = vsub.s32 0, %v318
    %v320 = vadd.s32 %v315, 1
    %vm321 = vcmp.gt.s32.totalorder %v320, 0
    %v322 = vsel %vm321, %v320, 0
    %v323 = vshrl.u32 %v322, 5
    %v324 = vand.u32 %v322, 31
    %v325 = vsub.s32 32, %v324
    %v326 = vshrl.u32 683565275, %v325
    %v327 = vshll.u32 683565275, %v324
    %v328 = vshrl.u32 2475754826, %v325
    %v329 = vor.u32 %v327, %v328
    %v330 = vshll.u32 2475754826, %v324
    %v331 = vshrl.u32 2131351028, %v325
    %v332 = vor.u32 %v330, %v331
    %v333 = vshll.u32 2131351028, %v324
    %v334 = vshrl.u32 2102212464, %v325
    %v335 = vor.u32 %v333, %v334
    %v336 = vshll.u32 2102212464, %v324
    %v337 = vshrl.u32 920167782, %v325
    %v338 = vor.u32 %v336, %v337
    %v339 = vshll.u32 920167782, %v324
    %v340 = vshrl.u32 1326507024, %v325
    %v341 = vor.u32 %v339, %v340
    %vm342 = vcmp.lt.s32.totalorder %v323, 1
    %vm343 = vcmp.lt.s32.totalorder %v323, 2
    %vm344 = vcmp.lt.s32.totalorder %v323, 3
    %vm345 = vcmp.lt.s32.totalorder %v323, 4
    %v346 = vsel %vm342, %v326, %v329
    %v347 = vsel %vm345, %v335, 2102212464
    %v348 = vsel %vm344, %v332, %v347
    %v349 = vsel %vm343, %v346, %v348
    %v350 = vsel %vm342, %v329, %v332
    %v351 = vsel %vm345, %v338, 920167782
    %v352 = vsel %vm344, %v335, %v351
    %v353 = vsel %vm343, %v350, %v352
    %v354 = vsel %vm342, %v332, %v335
    %v355 = vsel %vm345, %v341, 1326507024
    %v356 = vsel %vm344, %v338, %v355
    %v357 = vsel %vm343, %v354, %v356
    %v358 = vshll.u32 %v318, 8
    %v359 = vmul.u32.u64.compose %v358, %v357
    %v360 = vextract.low.u32 %v359
    %v361 = vextract.high.u32 %v359
    %v362 = vmul.u32.u64.compose %v358, %v353
    %v363 = vextract.low.u32 %v362
    %v364 = vextract.high.u32 %v362
    %v365 = vmul.u32 %v358, %v349
    %v366 = vadd.s32 %v361, %v363
    %vm367 = vc.u32 %v361, %v363
    %v368 = vadd.s32 %v364, 1
    %v369 = vsel %vm367, %v368, %v364
    %v370 = vadd.s32 %v365, %v369
    %v371 = vadd.s32 %v370, 536870912
    %v372 = vshrl.u32 %v371, 30
    %v373 = vshll.u32 %v372, 30
    %v374 = vsub.s32 %v370, %v373
    %vm375 = vcmp.lt.s32.totalorder %v374, 0
    %v376 = vsub.s32 0, %v374
    %v377 = vsel %vm375, %v376, %v374
    %v378 = vclz %v377
    %v379 = vsub.s32 %v378, 2
    %vm380 = vcmp.gt.s32.totalorder 0, %v379
    %v381 = vsel %vm380, 0, %v379
    %v382 = vsub.s32 32, %v381
    %v383 = vshll.u32 %v374, %v381
    %v384 = vshrl.u32 %v366, %v382
    %v385 = vor.u32 %v383, %v384
    %v386 = vsub.s32 4294967266, %v381
    %v387 = vadd.s32 %v386, 127
    %v388 = vshll.u32 %v387, 23
    %v389 = vor.u32 4788187, %v388
    %v390 = vand.u32 2147483647, %v389
    %v392 = vcvt.s32.f32 %v385
    %v393 = vmul.f32 %v392, %v390
    %v394 = vxor.u32 %v393, 2147483648
    %v395 = vsel %vm312, %v394, %v393
    %v396 = vsub.s32 4, %v372
    %v397 = vsel %vm312, %v396, %v372
    %v398 = vsel %vm311, %v204, %v395
    %v399 = vsel %vm311, 0, %v397
    %v400 = vcosq.f32.pop %v398
    %v401 = vsinq.f32.pop %v398
    %vm402 = vweird.f32 %v204
    %v403 = vand.u32 %v399, 3
    %vm404 = vcmp.lt.s32.totalorder %v403, 2
    %vm405 = vcmp.eq.s32.totalorder %v403, 0
    %v406 = vxor.u32 %v401, 2147483648
    %v407 = vsel %vm405, %v400, %v406
    %vm408 = vcmp.eq.s32.totalorder %v403, 2
    %v409 = vxor.u32 %v400, 2147483648
    %v410 = vsel %vm408, %v409, %v401
    %v411 = vsel %vm404, %v407, %v410
    %v412 = vsel %vm402, nan, %v411
    %v413 = vand.u32 2147483647, %v205
    %vm414 = vcmp.le.f32.partialorder %v413, 0.7853982
    %vm415 = vcmp.lt.s32.totalorder %v205, 0
    %v416 = vand.u32 %v205, 2139095040
    %v417 = vshrl.u32 %v416, 23
    %v418 = vsub.s32 %v417, 127
    %v419 = vand.u32 2147483647, %v205
    %v420 = vand.u32 %v419, 8388607
    %v421 = vor.u32 %v420, 8388608
    %v422 = vsub.s32 0, %v421
    %v423 = vadd.s32 %v418, 1
    %vm424 = vcmp.gt.s32.totalorder %v423, 0
    %v425 = vsel %vm424, %v423, 0
    %v426 = vshrl.u32 %v425, 5
    %v427 = vand.u32 %v425, 31
    %v428 = vsub.s32 32, %v427
    %v429 = vshrl.u32 683565275, %v428
    %v430 = vshll.u32 683565275, %v427
    %v431 = vshrl.u32 2475754826, %v428
    %v432 = vor.u32 %v430, %v431
    %v433 = vshll.u32 2475754826, %v427
    %v434 = vshrl.u32 2131351028, %v428
    %v435 = vor.u32 %v433, %v434
    %v436 = vshll.u32 2131351028, %v427
    %v437 = vshrl.u32 2102212464, %v428
    %v438 = vor.u32 %v436, %v437
    %v439 = vshll.u32 2102212464, %v427
    %v440 = vshrl.u32 920167782, %v428
    %v441 = vor.u32 %v439, %v440
    %v442 = vshll.u32 920167782, %v427
    %v443 = vshrl.u32 1326507024, %v428
    %v444 = vor.u32 %v442, %v443
    %vm445 = vcmp.lt.s32.totalorder %v426, 1
    %vm446 = vcmp.lt.s32.totalorder %v426, 2
    %vm447 = vcmp.lt.s32.totalorder %v426, 3
    %vm448 = vcmp.lt.s32.totalorder %v426, 4
    %v449 = vsel %vm445, %v429, %v432
    %v450 = vsel %vm448, %v438, 2102212464
    %v451 = vsel %vm447, %v435, %v450
    %v452 = vsel %vm446, %v449, %v451
    %v453 = vsel %vm445, %v432, %v435
    %v454 = vsel %vm448, %v441, 920167782
    %v455 = vsel %vm447, %v438, %v454
    %v456 = vsel %vm446, %v453, %v455
    %v457 = vsel %vm445, %v435, %v438
    %v458 = vsel %vm448, %v444, 1326507024
    %v459 = vsel %vm447, %v441, %v458
    %v460 = vsel %vm446, %v457, %v459
    %v461 = vshll.u32 %v421, 8
    %v462 = vmul.u32.u64.compose %v461, %v460
    %v463 = vextract.low.u32 %v462
    %v464 = vextract.high.u32 %v462
    %v465 = vmul.u32.u64.compose %v461, %v456
    %v466 = vextract.low.u32 %v465
    %v467 = vextract.high.u32 %v465
    %v468 = vmul.u32 %v461, %v452
    %v469 = vadd.s32 %v464, %v466
    %vm470 = vc.u32 %v464, %v466
    %v471 = vadd.s32 %v467, 1
    %v472 = vsel %vm470, %v471, %v467
    %v473 = vadd.s32 %v468, %v472
    %v474 = vadd.s32 %v473, 536870912
    %v475 = vshrl.u32 %v474, 30
    %v476 = vshll.u32 %v475, 30
    %v477 = vsub.s32 %v473, %v476
    %vm478 = vcmp.lt.s32.totalorder %v477, 0
    %v479 = vsub.s32 0, %v477
    %v480 = vsel %vm478, %v479, %v477
    %v481 = vclz %v480
    %v482 = vsub.s32 %v481, 2
    %vm483 = vcmp.gt.s32.totalorder 0, %v482
    %v484 = vsel %vm483, 0, %v482
    %v485 = vsub.s32 32, %v484
    %v486 = vshll.u32 %v477, %v484
    %v487 = vshrl.u32 %v469, %v485
    %v488 = vor.u32 %v486, %v487
    %v489 = vsub.s32 4294967266, %v484
    %v490 = vadd.s32 %v489, 127
    %v491 = vshll.u32 %v490, 23
    %v492 = vor.u32 4788187, %v491
    %v493 = vand.u32 2147483647, %v492
    %v495 = vcvt.s32.f32 %v488
    %v496 = vmul.f32 %v495, %v493
    %v497 = vxor.u32 %v496, 2147483648
    %v498 = vsel %vm415, %v497, %v496
    %v499 = vsub.s32 4, %v475
    %v500 = vsel %vm415, %v499, %v475
    %v501 = vsel %vm414, %v205, %v498
    %v502 = vsel %vm414, 0, %v500
    %v503 = vcosq.f32.pop %v501
    %v504 = vsinq.f32.pop %v501
    %vm505 = vweird.f32 %v205
    %v506 = vand.u32 %v502, 3
    %vm507 = vcmp.lt.s32.totalorder %v506, 2
    %vm508 = vcmp.eq.s32.totalorder %v506, 0
    %v509 = vxor.u32 %v504, 2147483648
    %v510 = vsel %vm508, %v503, %v509
    %vm511 = vcmp.eq.s32.totalorder %v506, 2
    %v512 = vxor.u32 %v503, 2147483648
    %v513 = vsel %vm511, %v512, %v504
    %v514 = vsel %vm507, %v510, %v513
    %v515 = vsel %vm505, nan, %v514
    %v516 = vand.u32 2147483647, %v206
    %vm517 = vcmp.le.f32.partialorder %v516, 0.7853982
    %vm518 = vcmp.lt.s32.totalorder %v206, 0
    %v519 = vand.u32 %v206, 2139095040
    %v520 = vshrl.u32 %v519, 23
    %v521 = vsub.s32 %v520, 127
    %v522 = vand.u32 2147483647, %v206
    %v523 = vand.u32 %v522, 8388607
    %v524 = vor.u32 %v523, 8388608
    %v525 = vsub.s32 0, %v524
    %v526 = vadd.s32 %v521, 1
    %vm527 = vcmp.gt.s32.totalorder %v526, 0
    %v528 = vsel %vm527, %v526, 0
    %v529 = vshrl.u32 %v528, 5
    %v530 = vand.u32 %v528, 31
    %v531 = vsub.s32 32, %v530
    %v532 = vshrl.u32 683565275, %v531
    %v533 = vshll.u32 683565275, %v530
    %v534 = vshrl.u32 2475754826, %v531
    %v535 = vor.u32 %v533, %v534
    %v536 = vshll.u32 2475754826, %v530
    %v537 = vshrl.u32 2131351028, %v531
    %v538 = vor.u32 %v536, %v537
    %v539 = vshll.u32 2131351028, %v530
    %v540 = vshrl.u32 2102212464, %v531
    %v541 = vor.u32 %v539, %v540
    %v542 = vshll.u32 2102212464, %v530
    %v543 = vshrl.u32 920167782, %v531
    %v544 = vor.u32 %v542, %v543
    %v545 = vshll.u32 920167782, %v530
    %v546 = vshrl.u32 1326507024, %v531
    %v547 = vor.u32 %v545, %v546
    %vm548 = vcmp.lt.s32.totalorder %v529, 1
    %vm549 = vcmp.lt.s32.totalorder %v529, 2
    %vm550 = vcmp.lt.s32.totalorder %v529, 3
    %vm551 = vcmp.lt.s32.totalorder %v529, 4
    %v552 = vsel %vm548, %v532, %v535
    %v553 = vsel %vm551, %v541, 2102212464
    %v554 = vsel %vm550, %v538, %v553
    %v555 = vsel %vm549, %v552, %v554
    %v556 = vsel %vm548, %v535, %v538
    %v557 = vsel %vm551, %v544, 920167782
    %v558 = vsel %vm550, %v541, %v557
    %v559 = vsel %vm549, %v556, %v558
    %v560 = vsel %vm548, %v538, %v541
    %v561 = vsel %vm551, %v547, 1326507024
    %v562 = vsel %vm550, %v544, %v561
    %v563 = vsel %vm549, %v560, %v562
    %v564 = vshll.u32 %v524, 8
    %v565 = vmul.u32.u64.compose %v564, %v563
    %v566 = vextract.low.u32 %v565
    %v567 = vextract.high.u32 %v565
    %v568 = vmul.u32.u64.compose %v564, %v559
    %v569 = vextract.low.u32 %v568
    %v570 = vextract.high.u32 %v568
    %v571 = vmul.u32 %v564, %v555
    %v572 = vadd.s32 %v567, %v569
    %vm573 = vc.u32 %v567, %v569
    %v574 = vadd.s32 %v570, 1
    %v575 = vsel %vm573, %v574, %v570
    %v576 = vadd.s32 %v571, %v575
    %v577 = vadd.s32 %v576, 536870912
    %v578 = vshrl.u32 %v577, 30
    %v579 = vshll.u32 %v578, 30
    %v580 = vsub.s32 %v576, %v579
    %vm581 = vcmp.lt.s32.totalorder %v580, 0
    %v582 = vsub.s32 0, %v580
    %v583 = vsel %vm581, %v582, %v580
    %v584 = vclz %v583
    %v585 = vsub.s32 %v584, 2
    %vm586 = vcmp.gt.s32.totalorder 0, %v585
    %v587 = vsel %vm586, 0, %v585
    %v588 = vsub.s32 32, %v587
    %v589 = vshll.u32 %v580, %v587
    %v590 = vshrl.u32 %v572, %v588
    %v591 = vor.u32 %v589, %v590
    %v592 = vsub.s32 4294967266, %v587
    %v593 = vadd.s32 %v592, 127
    %v594 = vshll.u32 %v593, 23
    %v595 = vor.u32 4788187, %v594
    %v596 = vand.u32 2147483647, %v595
    %v598 = vcvt.s32.f32 %v591
    %v599 = vmul.f32 %v598, %v596
    %v600 = vxor.u32 %v599, 2147483648
    %v601 = vsel %vm518, %v600, %v599
    %v602 = vsub.s32 4, %v578
    %v603 = vsel %vm518, %v602, %v578
    %v604 = vsel %vm517, %v206, %v601
    %v605 = vsel %vm517, 0, %v603
    %v606 = vcosq.f32.pop %v604
    %v607 = vsinq.f32.pop %v604
    %vm608 = vweird.f32 %v206
    %v609 = vand.u32 %v605, 3
    %vm610 = vcmp.lt.s32.totalorder %v609, 2
    %vm611 = vcmp.eq.s32.totalorder %v609, 0
    %v612 = vxor.u32 %v607, 2147483648
    %v613 = vsel %vm611, %v606, %v612
    %vm614 = vcmp.eq.s32.totalorder %v609, 2
    %v615 = vxor.u32 %v606, 2147483648
    %v616 = vsel %vm614, %v615, %v607
    %v617 = vsel %vm610, %v613, %v616
    %v618 = vsel %vm608, nan, %v617
    %v619 = vmul.f32 %v181, %v309
    %v620 = vmul.f32 %v188, %v412
    %v621 = vmul.f32 %v195, %v515
    %v622 = vmul.f32 %v202, %v618
    %v623 = vand.u32 2147483647, %v203
    %vm624 = vcmp.le.f32.partialorder %v623, 0.7853982
    %vm625 = vcmp.lt.s32.totalorder %v203, 0
    %v626 = vand.u32 %v203, 2139095040
    %v627 = vshrl.u32 %v626, 23
    %v628 = vsub.s32 %v627, 127
    %v629 = vand.u32 2147483647, %v203
    %v630 = vand.u32 %v629, 8388607
    %v631 = vor.u32 %v630, 8388608
    %v632 = vsub.s32 0, %v631
    %v633 = vadd.s32 %v628, 1
    %vm634 = vcmp.gt.s32.totalorder %v633, 0
    %v635 = vsel %vm634, %v633, 0
    %v636 = vshrl.u32 %v635, 5
    %v637 = vand.u32 %v635, 31
    %v638 = vsub.s32 32, %v637
    %v639 = vshrl.u32 683565275, %v638
    %v640 = vshll.u32 683565275, %v637
    %v641 = vshrl.u32 2475754826, %v638
    %v642 = vor.u32 %v640, %v641
    %v643 = vshll.u32 2475754826, %v637
    %v644 = vshrl.u32 2131351028, %v638
    %v645 = vor.u32 %v643, %v644
    %v646 = vshll.u32 2131351028, %v637
    %v647 = vshrl.u32 2102212464, %v638
    %v648 = vor.u32 %v646, %v647
    %v649 = vshll.u32 2102212464, %v637
    %v650 = vshrl.u32 920167782, %v638
    %v651 = vor.u32 %v649, %v650
    %v652 = vshll.u32 920167782, %v637
    %v653 = vshrl.u32 1326507024, %v638
    %v654 = vor.u32 %v652, %v653
    %vm655 = vcmp.lt.s32.totalorder %v636, 1
    %vm656 = vcmp.lt.s32.totalorder %v636, 2
    %vm657 = vcmp.lt.s32.totalorder %v636, 3
    %vm658 = vcmp.lt.s32.totalorder %v636, 4
    %v659 = vsel %vm655, %v639, %v642
    %v660 = vsel %vm658, %v648, 2102212464
    %v661 = vsel %vm657, %v645, %v660
    %v662 = vsel %vm656, %v659, %v661
    %v663 = vsel %vm655, %v642, %v645
    %v664 = vsel %vm658, %v651, 920167782
    %v665 = vsel %vm657, %v648, %v664
    %v666 = vsel %vm656, %v663, %v665
    %v667 = vsel %vm655, %v645, %v648
    %v668 = vsel %vm658, %v654, 1326507024
    %v669 = vsel %vm657, %v651, %v668
    %v670 = vsel %vm656, %v667, %v669
    %v671 = vshll.u32 %v631, 8
    %v672 = vmul.u32.u64.compose %v671, %v670
    %v673 = vextract.low.u32 %v672
    %v674 = vextract.high.u32 %v672
    %v675 = vmul.u32.u64.compose %v671, %v666
    %v676 = vextract.low.u32 %v675
    %v677 = vextract.high.u32 %v675
    %v678 = vmul.u32 %v671, %v662
    %v679 = vadd.s32 %v674, %v676
    %vm680 = vc.u32 %v674, %v676
    %v681 = vadd.s32 %v677, 1
    %v682 = vsel %vm680, %v681, %v677
    %v683 = vadd.s32 %v678, %v682
    %v684 = vadd.s32 %v683, 536870912
    %v685 = vshrl.u32 %v684, 30
    %v686 = vshll.u32 %v685, 30
    %v687 = vsub.s32 %v683, %v686
    %vm688 = vcmp.lt.s32.totalorder %v687, 0
    %v689 = vsub.s32 0, %v687
    %v690 = vsel %vm688, %v689, %v687
    %v691 = vclz %v690
    %v692 = vsub.s32 %v691, 2
    %vm693 = vcmp.gt.s32.totalorder 0, %v692
    %v694 = vsel %vm693, 0, %v692
    %v695 = vsub.s32 32, %v694
    %v696 = vshll.u32 %v687, %v694
    %v697 = vshrl.u32 %v679, %v695
    %v698 = vor.u32 %v696, %v697
    %v699 = vsub.s32 4294967266, %v694
    %v700 = vadd.s32 %v699, 127
    %v701 = vshll.u32 %v700, 23
    %v702 = vor.u32 4788187, %v701
    %v703 = vand.u32 2147483647, %v702
    %v705 = vcvt.s32.f32 %v698
    %v706 = vmul.f32 %v705, %v703
    %v707 = vxor.u32 %v706, 2147483648
    %v708 = vsel %vm625, %v707, %v706
    %v709 = vsub.s32 4, %v685
    %v710 = vsel %vm625, %v709, %v685
    %v711 = vsel %vm624, %v203, %v708
    %v712 = vsel %vm624, 0, %v710
    %v713 = vcosq.f32.pop %v711
    %v714 = vsinq.f32.pop %v711
    %vm715 = vweird.f32 %v203
    %v716 = vadd.s32 %v712, 3
    %v717 = vand.u32 %v716, 3
    %vm718 = vcmp.lt.s32.totalorder %v717, 2
    %vm719 = vcmp.eq.s32.totalorder %v717, 0
    %v720 = vxor.u32 %v714, 2147483648
    %v721 = vsel %vm719, %v713, %v720
    %vm722 = vcmp.eq.s32.totalorder %v717, 2
    %v723 = vxor.u32 %v713, 2147483648
    %v724 = vsel %vm722, %v723, %v714
    %v725 = vsel %vm718, %v721, %v724
    %v726 = vsel %vm715, nan, %v725
    %v727 = vand.u32 2147483647, %v204
    %vm728 = vcmp.le.f32.partialorder %v727, 0.7853982
    %vm729 = vcmp.lt.s32.totalorder %v204, 0
    %v730 = vand.u32 %v204, 2139095040
    %v731 = vshrl.u32 %v730, 23
    %v732 = vsub.s32 %v731, 127
    %v733 = vand.u32 2147483647, %v204
    %v734 = vand.u32 %v733, 8388607
    %v735 = vor.u32 %v734, 8388608
    %v736 = vsub.s32 0, %v735
    %v737 = vadd.s32 %v732, 1
    %vm738 = vcmp.gt.s32.totalorder %v737, 0
    %v739 = vsel %vm738, %v737, 0
    %v740 = vshrl.u32 %v739, 5
    %v741 = vand.u32 %v739, 31
    %v742 = vsub.s32 32, %v741
    %v743 = vshrl.u32 683565275, %v742
    %v744 = vshll.u32 683565275, %v741
    %v745 = vshrl.u32 2475754826, %v742
    %v746 = vor.u32 %v744, %v745
    %v747 = vshll.u32 2475754826, %v741
    %v748 = vshrl.u32 2131351028, %v742
    %v749 = vor.u32 %v747, %v748
    %v750 = vshll.u32 2131351028, %v741
    %v751 = vshrl.u32 2102212464, %v742
    %v752 = vor.u32 %v750, %v751
    %v753 = vshll.u32 2102212464, %v741
    %v754 = vshrl.u32 920167782, %v742
    %v755 = vor.u32 %v753, %v754
    %v756 = vshll.u32 920167782, %v741
    %v757 = vshrl.u32 1326507024, %v742
    %v758 = vor.u32 %v756, %v757
    %vm759 = vcmp.lt.s32.totalorder %v740, 1
    %vm760 = vcmp.lt.s32.totalorder %v740, 2
    %vm761 = vcmp.lt.s32.totalorder %v740, 3
    %vm762 = vcmp.lt.s32.totalorder %v740, 4
    %v763 = vsel %vm759, %v743, %v746
    %v764 = vsel %vm762, %v752, 2102212464
    %v765 = vsel %vm761, %v749, %v764
    %v766 = vsel %vm760, %v763, %v765
    %v767 = vsel %vm759, %v746, %v749
    %v768 = vsel %vm762, %v755, 920167782
    %v769 = vsel %vm761, %v752, %v768
    %v770 = vsel %vm760, %v767, %v769
    %v771 = vsel %vm759, %v749, %v752
    %v772 = vsel %vm762, %v758, 1326507024
    %v773 = vsel %vm761, %v755, %v772
    %v774 = vsel %vm760, %v771, %v773
    %v775 = vshll.u32 %v735, 8
    %v776 = vmul.u32.u64.compose %v775, %v774
    %v777 = vextract.low.u32 %v776
    %v778 = vextract.high.u32 %v776
    %v779 = vmul.u32.u64.compose %v775, %v770
    %v780 = vextract.low.u32 %v779
    %v781 = vextract.high.u32 %v779
    %v782 = vmul.u32 %v775, %v766
    %v783 = vadd.s32 %v778, %v780
    %vm784 = vc.u32 %v778, %v780
    %v785 = vadd.s32 %v781, 1
    %v786 = vsel %vm784, %v785, %v781
    %v787 = vadd.s32 %v782, %v786
    %v788 = vadd.s32 %v787, 536870912
    %v789 = vshrl.u32 %v788, 30
    %v790 = vshll.u32 %v789, 30
    %v791 = vsub.s32 %v787, %v790
    %vm792 = vcmp.lt.s32.totalorder %v791, 0
    %v793 = vsub.s32 0, %v791
    %v794 = vsel %vm792, %v793, %v791
    %v795 = vclz %v794
    %v796 = vsub.s32 %v795, 2
    %vm797 = vcmp.gt.s32.totalorder 0, %v796
    %v798 = vsel %vm797, 0, %v796
    %v799 = vsub.s32 32, %v798
    %v800 = vshll.u32 %v791, %v798
    %v801 = vshrl.u32 %v783, %v799
    %v802 = vor.u32 %v800, %v801
    %v803 = vsub.s32 4294967266, %v798
    %v804 = vadd.s32 %v803, 127
    %v805 = vshll.u32 %v804, 23
    %v806 = vor.u32 4788187, %v805
    %v807 = vand.u32 2147483647, %v806
    %v809 = vcvt.s32.f32 %v802
    %v810 = vmul.f32 %v809, %v807
    %v811 = vxor.u32 %v810, 2147483648
    %v812 = vsel %vm729, %v811, %v810
    %v813 = vsub.s32 4, %v789
    %v814 = vsel %vm729, %v813, %v789
    %v815 = vsel %vm728, %v204, %v812
    %v816 = vsel %vm728, 0, %v814
    %v817 = vcosq.f32.pop %v815
    %v818 = vsinq.f32.pop %v815
    %vm819 = vweird.f32 %v204
    %v820 = vadd.s32 %v816, 3
    %v821 = vand.u32 %v820, 3
    %vm822 = vcmp.lt.s32.totalorder %v821, 2
    %vm823 = vcmp.eq.s32.totalorder %v821, 0
    %v824 = vxor.u32 %v818, 2147483648
    %v825 = vsel %vm823, %v817, %v824
    %vm826 = vcmp.eq.s32.totalorder %v821, 2
    %v827 = vxor.u32 %v817, 2147483648
    %v828 = vsel %vm826, %v827, %v818
    %v829 = vsel %vm822, %v825, %v828
    %v830 = vsel %vm819, nan, %v829
    %v831 = vand.u32 2147483647, %v205
    %vm832 = vcmp.le.f32.partialorder %v831, 0.7853982
    %vm833 = vcmp.lt.s32.totalorder %v205, 0
    %v834 = vand.u32 %v205, 2139095040
    %v835 = vshrl.u32 %v834, 23
    %v836 = vsub.s32 %v835, 127
    %v837 = vand.u32 2147483647, %v205
    %v838 = vand.u32 %v837, 8388607
    %v839 = vor.u32 %v838, 8388608
    %v840 = vsub.s32 0, %v839
    %v841 = vadd.s32 %v836, 1
    %vm842 = vcmp.gt.s32.totalorder %v841, 0
    %v843 = vsel %vm842, %v841, 0
    %v844 = vshrl.u32 %v843, 5
    %v845 = vand.u32 %v843, 31
    %v846 = vsub.s32 32, %v845
    %v847 = vshrl.u32 683565275, %v846
    %v848 = vshll.u32 683565275, %v845
    %v849 = vshrl.u32 2475754826, %v846
    %v850 = vor.u32 %v848, %v849
    %v851 = vshll.u32 2475754826, %v845
    %v852 = vshrl.u32 2131351028, %v846
    %v853 = vor.u32 %v851, %v852
    %v854 = vshll.u32 2131351028, %v845
    %v855 = vshrl.u32 2102212464, %v846
    %v856 = vor.u32 %v854, %v855
    %v857 = vshll.u32 2102212464, %v845
    %v858 = vshrl.u32 920167782, %v846
    %v859 = vor.u32 %v857, %v858
    %v860 = vshll.u32 920167782, %v845
    %v861 = vshrl.u32 1326507024, %v846
    %v862 = vor.u32 %v860, %v861
    %vm863 = vcmp.lt.s32.totalorder %v844, 1
    %vm864 = vcmp.lt.s32.totalorder %v844, 2
    %vm865 = vcmp.lt.s32.totalorder %v844, 3
    %vm866 = vcmp.lt.s32.totalorder %v844, 4
    %v867 = vsel %vm863, %v847, %v850
    %v868 = vsel %vm866, %v856, 2102212464
    %v869 = vsel %vm865, %v853, %v868
    %v870 = vsel %vm864, %v867, %v869
    %v871 = vsel %vm863, %v850, %v853
    %v872 = vsel %vm866, %v859, 920167782
    %v873 = vsel %vm865, %v856, %v872
    %v874 = vsel %vm864, %v871, %v873
    %v875 = vsel %vm863, %v853, %v856
    %v876 = vsel %vm866, %v862, 1326507024
    %v877 = vsel %vm865, %v859, %v876
    %v878 = vsel %vm864, %v875, %v877
    %v879 = vshll.u32 %v839, 8
    %v880 = vmul.u32.u64.compose %v879, %v878
    %v881 = vextract.low.u32 %v880
    %v882 = vextract.high.u32 %v880
    %v883 = vmul.u32.u64.compose %v879, %v874
    %v884 = vextract.low.u32 %v883
    %v885 = vextract.high.u32 %v883
    %v886 = vmul.u32 %v879, %v870
    %v887 = vadd.s32 %v882, %v884
    %vm888 = vc.u32 %v882, %v884
    %v889 = vadd.s32 %v885, 1
    %v890 = vsel %vm888, %v889, %v885
    %v891 = vadd.s32 %v886, %v890
    %v892 = vadd.s32 %v891, 536870912
    %v893 = vshrl.u32 %v892, 30
    %v894 = vshll.u32 %v893, 30
    %v895 = vsub.s32 %v891, %v894
    %vm896 = vcmp.lt.s32.totalorder %v895, 0
    %v897 = vsub.s32 0, %v895
    %v898 = vsel %vm896, %v897, %v895
    %v899 = vclz %v898
    %v900 = vsub.s32 %v899, 2
    %vm901 = vcmp.gt.s32.totalorder 0, %v900
    %v902 = vsel %vm901, 0, %v900
    %v903 = vsub.s32 32, %v902
    %v904 = vshll.u32 %v895, %v902
    %v905 = vshrl.u32 %v887, %v903
    %v906 = vor.u32 %v904, %v905
    %v907 = vsub.s32 4294967266, %v902
    %v908 = vadd.s32 %v907, 127
    %v909 = vshll.u32 %v908, 23
    %v910 = vor.u32 4788187, %v909
    %v911 = vand.u32 2147483647, %v910
    %v913 = vcvt.s32.f32 %v906
    %v914 = vmul.f32 %v913, %v911
    %v915 = vxor.u32 %v914, 2147483648
    %v916 = vsel %vm833, %v915, %v914
    %v917 = vsub.s32 4, %v893
    %v918 = vsel %vm833, %v917, %v893
    %v919 = vsel %vm832, %v205, %v916
    %v920 = vsel %vm832, 0, %v918
    %v921 = vcosq.f32.pop %v919
    %v922 = vsinq.f32.pop %v919
    %vm923 = vweird.f32 %v205
    %v924 = vadd.s32 %v920, 3
    %v925 = vand.u32 %v924, 3
    %vm926 = vcmp.lt.s32.totalorder %v925, 2
    %vm927 = vcmp.eq.s32.totalorder %v925, 0
    %v928 = vxor.u32 %v922, 2147483648
    %v929 = vsel %vm927, %v921, %v928
    %vm930 = vcmp.eq.s32.totalorder %v925, 2
    %v931 = vxor.u32 %v921, 2147483648
    %v932 = vsel %vm930, %v931, %v922
    %v933 = vsel %vm926, %v929, %v932
    %v934 = vsel %vm923, nan, %v933
    %v935 = vand.u32 2147483647, %v206
    %vm936 = vcmp.le.f32.partialorder %v935, 0.7853982
    %vm937 = vcmp.lt.s32.totalorder %v206, 0
    %v938 = vand.u32 %v206, 2139095040
    %v939 = vshrl.u32 %v938, 23
    %v940 = vsub.s32 %v939, 127
    %v941 = vand.u32 2147483647, %v206
    %v942 = vand.u32 %v941, 8388607
    %v943 = vor.u32 %v942, 8388608
    %v944 = vsub.s32 0, %v943
    %v945 = vadd.s32 %v940, 1
    %vm946 = vcmp.gt.s32.totalorder %v945, 0
    %v947 = vsel %vm946, %v945, 0
    %v948 = vshrl.u32 %v947, 5
    %v949 = vand.u32 %v947, 31
    %v950 = vsub.s32 32, %v949
    %v951 = vshrl.u32 683565275, %v950
    %v952 = vshll.u32 683565275, %v949
    %v953 = vshrl.u32 2475754826, %v950
    %v954 = vor.u32 %v952, %v953
    %v955 = vshll.u32 2475754826, %v949
    %v956 = vshrl.u32 2131351028, %v950
    %v957 = vor.u32 %v955, %v956
    %v958 = vshll.u32 2131351028, %v949
    %v959 = vshrl.u32 2102212464, %v950
    %v960 = vor.u32 %v958, %v959
    %v961 = vshll.u32 2102212464, %v949
    %v962 = vshrl.u32 920167782, %v950
    %v963 = vor.u32 %v961, %v962
    %v964 = vshll.u32 920167782, %v949
    %v965 = vshrl.u32 1326507024, %v950
    %v966 = vor.u32 %v964, %v965
    %vm967 = vcmp.lt.s32.totalorder %v948, 1
    %vm968 = vcmp.lt.s32.totalorder %v948, 2
    %vm969 = vcmp.lt.s32.totalorder %v948, 3
    %vm970 = vcmp.lt.s32.totalorder %v948, 4
    %v971 = vsel %vm967, %v951, %v954
    %v972 = vsel %vm970, %v960, 2102212464
    %v973 = vsel %vm969, %v957, %v972
    %v974 = vsel %vm968, %v971, %v973
    %v975 = vsel %vm967, %v954, %v957
    %v976 = vsel %vm970, %v963, 920167782
    %v977 = vsel %vm969, %v960, %v976
    %v978 = vsel %vm968, %v975, %v977
    %v979 = vsel %vm967, %v957, %v960
    %v980 = vsel %vm970, %v966, 1326507024
    %v981 = vsel %vm969, %v963, %v980
    %v982 = vsel %vm968, %v979, %v981
    %v983 = vshll.u32 %v943, 8
    %v984 = vmul.u32.u64.compose %v983, %v982
    %v985 = vextract.low.u32 %v984
    %v986 = vextract.high.u32 %v984
    %v987 = vmul.u32.u64.compose %v983, %v978
    %v988 = vextract.low.u32 %v987
    %v989 = vextract.high.u32 %v987
    %v990 = vmul.u32 %v983, %v974
    %v991 = vadd.s32 %v986, %v988
    %vm992 = vc.u32 %v986, %v988
    %v993 = vadd.s32 %v989, 1
    %v994 = vsel %vm992, %v993, %v989
    %v995 = vadd.s32 %v990, %v994
    %v996 = vadd.s32 %v995, 536870912
    %v997 = vshrl.u32 %v996, 30
    %v998 = vshll.u32 %v997, 30
    %v999 = vsub.s32 %v995, %v998
    %vm1000 = vcmp.lt.s32.totalorder %v999, 0
    %v1001 = vsub.s32 0, %v999
    %v1002 = vsel %vm1000, %v1001, %v999
    %v1003 = vclz %v1002
    %v1004 = vsub.s32 %v1003, 2
    %vm1005 = vcmp.gt.s32.totalorder 0, %v1004
    %v1006 = vsel %vm1005, 0, %v1004
    %v1007 = vsub.s32 32, %v1006
    %v1008 = vshll.u32 %v999, %v1006
    %v1009 = vshrl.u32 %v991, %v1007
    %v1010 = vor.u32 %v1008, %v1009
    %v1011 = vsub.s32 4294967266, %v1006
    %v1012 = vadd.s32 %v1011, 127
    %v1013 = vshll.u32 %v1012, 23
    %v1014 = vor.u32 4788187, %v1013
    %v1015 = vand.u32 2147483647, %v1014
    %v1017 = vcvt.s32.f32 %v1010
    %v1018 = vmul.f32 %v1017, %v1015
    %v1019 = vxor.u32 %v1018, 2147483648
    %v1020 = vsel %vm937, %v1019, %v1018
    %v1021 = vsub.s32 4, %v997
    %v1022 = vsel %vm937, %v1021, %v997
    %v1023 = vsel %vm936, %v206, %v1020
    %v1024 = vsel %vm936, 0, %v1022
    %v1025 = vcosq.f32.pop %v1023
    %v1026 = vsinq.f32.pop %v1023
    %vm1027 = vweird.f32 %v206
    %v1028 = vadd.s32 %v1024, 3
    %v1029 = vand.u32 %v1028, 3
    %vm1030 = vcmp.lt.s32.totalorder %v1029, 2
    %vm1031 = vcmp.eq.s32.totalorder %v1029, 0
    %v1032 = vxor.u32 %v1026, 2147483648
    %v1033 = vsel %vm1031, %v1025, %v1032
    %vm1034 = vcmp.eq.s32.totalorder %v1029, 2
    %v1035 = vxor.u32 %v1025, 2147483648
    %v1036 = vsel %vm1034, %v1035, %v1026
    %v1037 = vsel %vm1030, %v1033, %v1036
    %v1038 = vsel %vm1027, nan, %v1037
    %v1039 = vmul.f32 %v181, %v726
    %v1040 = vmul.f32 %v188, %v830
    %v1041 = vmul.f32 %v195, %v934
    %v1042 = vmul.f32 %v202, %v1038
    %v1043 = vld [vmem:[#allocation3] sm:$0xff]
    %v1044 = vld [vmem:[#allocation3 + $0x8] sm:$0xff]
    %v1045 = vmul.f32 %v619, 0.1
    %v1046 = vmul.f32 %v620, 0.1
    %v1047 = vmul.f32 %v621, 0.1
    %v1048 = vmul.f32 %v622, 0.1
    %v1053 = vcombine.low %v1045, %v1046
    %v1054 = vcombine.low %v1047, %v1048
    %v1056 = vunpack.c.l.s4 1983009808
    %v1057 = vunpack.c.0.s8 %v1056
    %v1058 = vlaneseq
    %v1059 = vshrl.u32 %v1058, 7
    %v1060 = vsub.s32 %v1057, %v1059
    %v1061 = vrot.slane %v1053, %v1060
    %v1063 = vunpack.c.l.s4 1983009808
    %v1064 = vunpack.c.0.s8 %v1063
    %v1065 = vlaneseq
    %v1066 = vshrl.u32 %v1065, 7
    %v1067 = vsub.s32 %v1064, %v1066
    %v1068 = vrot.slane %v1054, %v1067
    %v1069 = vcombine.low %v1061, %v1068
    %v1071 = vadd.f32 %v1043, %v1069
    %1072 = vst [vmem:[#allocation6] sm:$0xff] %v1071
    %v1073 = vmul.f32 %v1039, 0.1
    %v1074 = vmul.f32 %v1040, 0.1
    %v1075 = vmul.f32 %v1041, 0.1
    %v1076 = vmul.f32 %v1042, 0.1
    %v1081 = vcombine.low %v1073, %v1074
    %v1082 = vcombine.low %v1075, %v1076
    %v1084 = vunpack.c.l.s4 1983009808
    %v1085 = vunpack.c.0.s8 %v1084
    %v1086 = vlaneseq
    %v1087 = vshrl.u32 %v1086, 7
    %v1088 = vsub.s32 %v1085, %v1087
    %v1089 = vrot.slane %v1081, %v1088
    %v1091 = vunpack.c.l.s4 1983009808
    %v1092 = vunpack.c.0.s8 %v1091
    %v1093 = vlaneseq
    %v1094 = vshrl.u32 %v1093, 7
    %v1095 = vsub.s32 %v1092, %v1094
    %v1096 = vrot.slane %v1082, %v1095
    %v1097 = vcombine.low %v1089, %v1096
    %v1099 = vadd.f32 %v1044, %v1097
    %1100 = vst [vmem:[#allocation6 + $0x8] sm:$0xff] %v1099
    // Predicated region
    $region14: #{tpu_custom_call.1} parent=1 // pred_check
      _
    $region15: #{tpu_custom_call.1} parent=1 // pred_check_branch
      %1102 = sbr.rel (0) target = $region17
    $region16: #{tpu_custom_call.1} parent=1 // pred_region
      %s1104 = ssub.s32 256, 256
      %1105 = vsyncadd [#allocation5], %s1104
      %s1107 = sshll.u32 [#allocation6], 4
      %s1108 = int_to_ptr.vmem [resolvable:$true] %s1107
      %1110 = dma.vmem_to_hbm [thread:$0]  %s1108, 256, %s2, [#allocation5]
    $region17: #{tpu_custom_call.1} parent=1 // pred_fallthru
      _
    // Predicated region
    $region18: #{tpu_custom_call.1} parent=1 // pred_check
      _
    $region19: #{tpu_custom_call.1} parent=1 // pred_check_branch
      %1112 = sbr.rel (0) target = $region21
    $region20: #{tpu_custom_call.1} parent=1 // pred_region
      %1113 = dma.done [#allocation5], 256
    $region21: #{tpu_custom_call.1} parent=1 // pred_fallthru
      _
    %1114 = vsyncpa [#allocation4], 1
    %1115 = vsyncpa [#allocation5], 1

</llo_original>
